<compile_context>
chip_gen: v5e
topology: v5e:2x2
jax: 0.10.0
libtpu: 0.0.40
codegen_flags: <defaults>
</compile_context>

<pallas_src>
import jax
import jax.numpy as jnp
from jax.experimental import pallas as pl
from jax.experimental.pallas import tpu as pltpu


def quadratic_kernel(x_ref, q_ref, w_ref, b_ref, o_ref):
    # x_ref: (TILE_N, D) VMEM   q_ref: (D, D) VMEM   w_ref: (1, D) VMEM
    # b_ref: (1, 1) SMEM scalar o_ref: (1, TILE_N) VMEM
    x = x_ref[...]                                   # (TILE_N, D) f32
    q = q_ref[...]                                   # (D, D)     f32
    w = w_ref[...]                                   # (1, D)     f32
    b = b_ref[0, 0]                                  # scalar

    # MXU: (TILE_N, D) @ (D, D) -> (TILE_N, D), f32 accumulation.
    xq = jnp.dot(x, q, preferred_element_type=jnp.float32)

    # Fused quadratic + linear terms:
    #   sum(x * (xq + w), -1) = diag(X Q X^T) + X @ W^T
    out = b + jnp.sum(x * (xq + w), axis=-1)         # (TILE_N,)

    # Single lane-dense store of the (1, TILE_N) slab.
    o_ref[...] = out[None, :].astype(o_ref.dtype)


def _round_up(x, m):
    return ((x + m - 1) // m) * m


def _choose_tile_n(N, D):
    """Pick a lane-dense tile: multiple of 128, ~4 MiB of X, <=~24 MiB VMEM."""
    row_bytes = 4 * D
    target_bytes = 4 * 1024 * 1024
    budget_bytes = 24 * 1024 * 1024
    q_bytes = 4 * D * D                       # resident Q
    per_row = 2 * row_bytes + 2 * 4           # double-buffered X + output col
    vmem_cap = max((budget_bytes - q_bytes) // per_row, 128)
    tile = min(max(target_bytes // row_bytes, 128), vmem_cap, 32768)
    tile = max((tile // 128) * 128, 128)
    # No point tiling past the (lane-padded) problem size.
    return min(tile, _round_up(N, 128))


def quadratic_forward(X, Q, W, b, *, tile_n=None):
    X = jnp.asarray(X, jnp.float32)
    Q = jnp.asarray(Q, jnp.float32)
    W = jnp.asarray(W, jnp.float32).reshape(1, -1)
    b_arr = jnp.reshape(b, (1, 1)).astype(jnp.float32)

    N, D = X.shape
    if tile_n is None:
        tile_n = _choose_tile_n(N, D)
    else:
        tile_n = min(max(_round_up(tile_n, 128), 128), _round_up(N, 128))

    grid = (pl.cdiv(N, tile_n),)

    out = pl.pallas_call(
        quadratic_kernel,
        out_shape=jax.ShapeDtypeStruct((1, N), jnp.float32),
        grid_spec=pltpu.PrefetchScalarGridSpec(
            num_scalar_prefetch=0,
            grid=grid,
            in_specs=[
                pl.BlockSpec((tile_n, D), lambda i: (i, 0)),   # X: streamed tiles
                pl.BlockSpec((D, D), lambda i: (0, 0)),        # Q: resident
                pl.BlockSpec((1, D), lambda i: (0, 0)),        # W: resident
                pl.BlockSpec(memory_space=pltpu.SMEM),         # b: scalar in SMEM
            ],
            out_specs=pl.BlockSpec((1, tile_n), lambda i: (0, i)),
        ),
        compiler_params=pltpu.CompilerParams(
            # Independent N tiles -> megacore-shardable on v7x; no-op on
            # single-TC v5e/v6e. VMEM footprint is kept <= ~24 MiB by
            # _choose_tile_n, under the default scoped limit everywhere.
            dimension_semantics=("parallel",),
        ),
    )(X, Q, W, b_arr)

    return out


def _reference(X, Q, W, b):
    return b + jnp.matmul(W, X.T) + jnp.diag(jnp.matmul(jnp.matmul(X, Q), X.T))


if __name__ == "__main__":
    key = jax.random.PRNGKey(0)

    # Small shapes consistent with the module: N samples, var_num features.
    N, var_num = 8, 32
    kx, kq, kw, kb, k2 = jax.random.split(key, 5)
    X = jax.random.normal(kx, (N, var_num), dtype=jnp.float32)
    Q = jax.random.normal(kq, (var_num, var_num), dtype=jnp.float32)
    W = jax.random.normal(kw, (1, var_num), dtype=jnp.float32)
    b = jax.random.normal(kb, (), dtype=jnp.float32)

    out = jax.block_until_ready(quadratic_forward(X, Q, W, b))
    ref = _reference(X, Q, W, b)
    assert out.shape == (1, N), out.shape
    assert jnp.allclose(out, ref, atol=1e-4, rtol=1e-4)

    # Second check exercising the no-pad partial-tile path (N not a multiple
    # of the tile, D not a multiple of 128).
    N2, D2 = 300, 40
    X2 = jax.random.normal(k2, (N2, D2), dtype=jnp.float32)
    Q2 = jax.random.normal(kq, (D2, D2), dtype=jnp.float32)
    W2 = jax.random.normal(kw, (1, D2), dtype=jnp.float32)
    out2 = jax.block_until_ready(quadratic_forward(X2, Q2, W2, b, tile_n=128))
    ref2 = _reference(X2, Q2, W2, b)
    assert out2.shape == (1, N2), out2.shape
    assert jnp.allclose(out2, ref2, atol=1e-3, rtol=1e-3)

    print("KERNEL_OK")
</pallas_src>

<mosaic_0001>
module attributes {stable_mosaic.version = 11 : i64} {
  func.func @quadratic_kernel(%arg0: i32, %arg1: memref<128x32xf32, #tpu.memory_space<vmem>>, %arg2: memref<32x32xf32, #tpu.memory_space<vmem>>, %arg3: memref<1x32xf32, #tpu.memory_space<vmem>>, %arg4: memref<1x1xf32, #tpu.memory_space<smem>>, %arg5: memref<1x128xf32, #tpu.memory_space<vmem>>) attributes {dimension_semantics = [#tpu.dimension_semantics<parallel>], iteration_bounds = array<i64: 1>, scalar_prefetch = 0 : i64, scratch_operands = 0 : i64, tpu.core_type = #tpu.core_type<tc>, window_params = [{transform_indices = @transform_0, window_bounds = array<i64: 128, 32>}, {pipeline_mode = #tpu.pipeline_mode<synchronous>, transform_indices = @transform_1, window_bounds = array<i64: 32, 32>}, {pipeline_mode = #tpu.pipeline_mode<synchronous>, transform_indices = @transform_2, window_bounds = array<i64: 1, 32>}, {transform_indices = @transform_3, window_bounds = array<i64: 1, 1>}, {transform_indices = @transform_4, window_bounds = array<i64: 1, 128>}]} {
    %c0 = arith.constant 0 : index
    %c0_0 = arith.constant 0 : index
    %0 = vector.load %arg1[%c0, %c0_0] : memref<128x32xf32, #tpu.memory_space<vmem>>, vector<128x32xf32>
    %c0_1 = arith.constant 0 : index
    %c0_2 = arith.constant 0 : index
    %1 = vector.load %arg2[%c0_1, %c0_2] : memref<32x32xf32, #tpu.memory_space<vmem>>, vector<32x32xf32>
    %c0_3 = arith.constant 0 : index
    %c0_4 = arith.constant 0 : index
    %2 = vector.load %arg3[%c0_3, %c0_4] : memref<1x32xf32, #tpu.memory_space<vmem>>, vector<1x32xf32>
    %c0_5 = arith.constant 0 : index
    %c0_6 = arith.constant 0 : index
    %3 = memref.load %arg4[%c0_5, %c0_6] : memref<1x1xf32, #tpu.memory_space<smem>>
    %cst = arith.constant dense<0.000000e+00> : vector<128x32xf32>
    %4 = tpu.matmul %0, %1, %cst {dimension_numbers = #tpu.dot_dimension_numbers<[1], [0], [0], [1], [0, 0, 1, 1], [], []>} : vector<128x32xf32>, vector<32x32xf32>, vector<128x32xf32> -> vector<128x32xf32>
    %5 = vector.broadcast %2 : vector<1x32xf32> to vector<128x32xf32>
    %6 = arith.addf %4, %5 : vector<128x32xf32>
    %7 = arith.mulf %0, %6 : vector<128x32xf32>
    %cst_7 = arith.constant dense<0.000000e+00> : vector<128xf32>
    %8 = vector.multi_reduction <add>, %7, %cst_7 [1] : vector<128x32xf32> to vector<128xf32>
    %9 = vector.broadcast %3 : f32 to vector<128xf32>
    %10 = arith.addf %9, %8 : vector<128xf32>
    %11 = vector.shape_cast %10 : vector<128xf32> to vector<1x128xf32>
    %c0_8 = arith.constant 0 : index
    %c0_9 = arith.constant 0 : index
    %12 = vector.load %arg5[%c0_8, %c0_9] : memref<1x128xf32, #tpu.memory_space<vmem>>, vector<1x128xf32>
    tpu.vector_store %arg5[%c0_8, %c0_9], %11 {strides = array<i32>} : memref<1x128xf32, #tpu.memory_space<vmem>>, vector<1x128xf32>,
    return
  }
  func.func @transform_0(%arg0: i32) -> (i32, i32) {
    %c0_i32 = arith.constant 0 : i32
    %c0_i32_0 = arith.constant 0 : i32
    return %arg0, %c0_i32 : i32, i32
  }
  func.func @transform_1(%arg0: i32) -> (i32, i32) {
    %c0_i32 = arith.constant 0 : i32
    %c0_i32_0 = arith.constant 0 : i32
    %c0_i32_1 = arith.constant 0 : i32
    return %c0_i32, %c0_i32_0 : i32, i32
  }
  func.func @transform_2(%arg0: i32) -> (i32, i32) {
    %c0_i32 = arith.constant 0 : i32
    %c0_i32_0 = arith.constant 0 : i32
    %c0_i32_1 = arith.constant 0 : i32
    return %c0_i32, %c0_i32_0 : i32, i32
  }
  func.func @transform_3(%arg0: i32) -> (i32, i32) {
    %c0_i32 = arith.constant 0 : i32
    %c0_i32_0 = arith.constant 0 : i32
    %c0_i32_1 = arith.constant 0 : i32
    return %c0_i32, %c0_i32_0 : i32, i32
  }
  func.func @transform_4(%arg0: i32) -> (i32, i32) {
    %c0_i32 = arith.constant 0 : i32
    %c0_i32_0 = arith.constant 0 : i32
    return %c0_i32, %arg0 : i32, i32
  }
}

</mosaic_0001>

<llo_original>
// kernel: tpu_custom_call.1
$region0: #{tpu_custom_call.1}
  #allocation0 [shape = 'u32[]', space=smem, size = 0x4, offset = 0x4, fixed_abs, tag = 'smem constant byte address 0x4 - core index']
  #allocation1 [shape = 'u32[72,128]{1,0:T(1,128)}', space=vmem, size = 0x9000, scoped, tag = 'internal scratch']
  #allocation2 [shape = 'f32[1,1]{1,0:T(1,128)S(6)}', space=smem, size = 0x200, scoped, tag = 'scoped memory for tpu_custom_call.1']
  %s0 = inlined_call_operand.hbm [shape: f32[8,32], index: 0, kind: input, shape index: {}]
  %s1 = inlined_call_operand.hbm [shape: f32[32,32], index: 1, kind: input, shape index: {}]
  %s2 = inlined_call_operand.vmem [shape: f32[1,32], index: 2, kind: input, shape index: {}]
  %s3 = inlined_call_operand.<no memory space> [shape: f32[1,1], index: 3, kind: input, shape index: {}]
  %s4 = inlined_call_operand.hbm [shape: f32[1,8], index: 4, kind: output, shape index: {}]
  %s5 = sld [smem:[#allocation0]]
  $region34: #{tpu_custom_call.1} parent=0
    _
  %s7 = ssub.s32 1, %s5
  %s8 = scalar_select 0, %s7, %s5
  %9 = sst [smem:[#allocation2]] %s3
  $region1: #{tpu_custom_call.1} parent=0
    #allocation3 [shape = 'u8[65536]{0}', space=vmem, size = 0x10000, scoped, tag = 'input window, operand 0, single buffered']
    #allocation4 [shape = 's32[1]{0}', space=sflag, size = 0x4, scoped, tag = 'scoped memory for tpu_custom_call.1']
    #allocation5 [shape = 's32[1]{0}', space=sflag, size = 0x4, scoped, tag = 'scoped memory for tpu_custom_call.1']
    #allocation6 [shape = 'u8[16384]{0}', space=vmem, size = 0x4000, scoped, tag = 'input window, operand 1, single buffered']
    #allocation7 [shape = 's32[1]{0}', space=sflag, size = 0x4, scoped, tag = 'scoped memory for tpu_custom_call.1']
    #allocation8 [shape = 'u8[512]{0}', space=vmem, size = 0x400, scoped, tag = 'output window, operand 0, single buffered']
    %10 = vsyncpa [#allocation4], 0
    %11 = vsyncpa [#allocation7], 0
    %12 = vsyncpa [#allocation5], 0
    // Predicated region
    $region2: #{tpu_custom_call.1} parent=1 // pred_check
      _
    $region3: #{tpu_custom_call.1} parent=1 // pred_check_branch
      %14 = sbr.rel (0) target = $region5
    $region4: #{tpu_custom_call.1} parent=1 // pred_region
      %16 = vsyncadd [#allocation4], 1920
      %s17 = sshll.u32 %s0, 4
      %s18 = int_to_ptr.hbm [resolvable:$true] %s17
      %s19 = sshll.u32 [#allocation3], 4
      %s20 = int_to_ptr.vmem [resolvable:$true] %s19
      %25 = dma.hbm_to_vmem [thread:$0]  %s18, 128, %s20, [#allocation4], 128, 128, 8
    $region5: #{tpu_custom_call.1} parent=1 // pred_fallthru
      _
    // Predicated region
    $region6: #{tpu_custom_call.1} parent=1 // pred_check
      _
    $region7: #{tpu_custom_call.1} parent=1 // pred_check_branch
      %27 = sbr.rel (0) target = $region9
    $region8: #{tpu_custom_call.1} parent=1 // pred_region
      %29 = vsyncadd [#allocation7], 0
      %s30 = sshll.u32 %s1, 4
      %s31 = int_to_ptr.hbm [resolvable:$true] %s30
      %s32 = sshll.u32 [#allocation6], 4
      %s33 = int_to_ptr.vmem [resolvable:$true] %s32
      %38 = dma.hbm_to_vmem [thread:$0]  %s31, 512, %s33, [#allocation7], 128, 128, 8
    $region9: #{tpu_custom_call.1} parent=1 // pred_fallthru
      _
    // Predicated region
    $region10: #{tpu_custom_call.1} parent=1 // pred_check
      _
    $region11: #{tpu_custom_call.1} parent=1 // pred_check_branch
      %40 = sbr.rel (0) target = $region13
    $region12: #{tpu_custom_call.1} parent=1 // pred_region
      _
    $region13: #{tpu_custom_call.1} parent=1 // pred_fallthru
      _
    // Predicated region
    $region14: #{tpu_custom_call.1} parent=1 // pred_check
      _
    $region15: #{tpu_custom_call.1} parent=1 // pred_check_branch
      %42 = sbr.rel (0) target = $region17
    $region16: #{tpu_custom_call.1} parent=1 // pred_region
      _
    $region17: #{tpu_custom_call.1} parent=1 // pred_fallthru
      _
    // Predicated region
    $region18: #{tpu_custom_call.1} parent=1 // pred_check
      _
    $region19: #{tpu_custom_call.1} parent=1 // pred_check_branch
      %44 = sbr.rel (0) target = $region21
    $region20: #{tpu_custom_call.1} parent=1 // pred_region
      %46 = dma.done [#allocation4], 2048
    $region21: #{tpu_custom_call.1} parent=1 // pred_fallthru
      _
    // Predicated region
    $region22: #{tpu_custom_call.1} parent=1 // pred_check
      _
    $region23: #{tpu_custom_call.1} parent=1 // pred_check_branch
      %48 = sbr.rel (0) target = $region25
    $region24: #{tpu_custom_call.1} parent=1 // pred_region
      %50 = dma.done [#allocation7], 512
    $region25: #{tpu_custom_call.1} parent=1 // pred_fallthru
      _
    %v51 = vld [vmem:[#allocation3] sm:$0xff]
    %v52 = vld [vmem:[#allocation3 + $0x8] sm:$0xff]
    %v53 = vld [vmem:[#allocation3 + $0x10] sm:$0xff]
    %v54 = vld [vmem:[#allocation3 + $0x18] sm:$0xff]
    %v55 = vld [vmem:[#allocation3 + $0x20] sm:$0xff]
    %v56 = vld [vmem:[#allocation3 + $0x28] sm:$0xff]
    %v57 = vld [vmem:[#allocation3 + $0x30] sm:$0xff]
    %v58 = vld [vmem:[#allocation3 + $0x38] sm:$0xff]
    %v59 = vld [vmem:[#allocation3 + $0x40] sm:$0xff]
    %v60 = vld [vmem:[#allocation3 + $0x48] sm:$0xff]
    %v61 = vld [vmem:[#allocation3 + $0x50] sm:$0xff]
    %v62 = vld [vmem:[#allocation3 + $0x58] sm:$0xff]
    %v63 = vld [vmem:[#allocation3 + $0x60] sm:$0xff]
    %v64 = vld [vmem:[#allocation3 + $0x68] sm:$0xff]
    %v65 = vld [vmem:[#allocation3 + $0x70] sm:$0xff]
    %v66 = vld [vmem:[#allocation3 + $0x78] sm:$0xff]
    %v67 = vld [vmem:[#allocation6] sm:$0xff]
    %v68 = vld [vmem:[#allocation6 + $0x8] sm:$0xff]
    %v69 = vld [vmem:[#allocation6 + $0x10] sm:$0xff]
    %v70 = vld [vmem:[#allocation6 + $0x18] sm:$0xff]
    %v71 = vld [vmem:[%s2] sm:$0x1]
    %s72 = sld [smem:[#allocation2]]
    %v74 = vperm.slane %v71, 0
    %vm76 = vcmask 261120
    %v78 = vsel %vm76, %v51, 0
    %v81 = vsel %vm76, %v52, 0
    %v84 = vsel %vm76, %v53, 0
    %v87 = vsel %vm76, %v54, 0
    %v90 = vsel %vm76, %v55, 0
    %v93 = vsel %vm76, %v56, 0
    %v96 = vsel %vm76, %v57, 0
    %v99 = vsel %vm76, %v58, 0
    %v102 = vsel %vm76, %v59, 0
    %v105 = vsel %vm76, %v60, 0
    %v108 = vsel %vm76, %v61, 0
    %v111 = vsel %vm76, %v62, 0
    %v114 = vsel %vm76, %v63, 0
    %v117 = vsel %vm76, %v64, 0
    %v120 = vsel %vm76, %v65, 0
    %v123 = vsel %vm76, %v66, 0
    %125 = vmatpush.msra.mxu0 0.0
    %126 = vmatpush.msra.mxu0 0.0
    %127 = vmatpush.msra.mxu0 0.0
    %128 = vmatpush.msra.mxu0 0.0
    %129 = vmatpush.msra.mxu0 0.0
    %130 = vmatpush.msra.mxu0 0.0
    %131 = vmatpush.msra.mxu0 0.0
    %132 = vmatpush.msra.mxu0 0.0
    %133 = vmatpush.msra.mxu0 0.0
    %134 = vmatpush.msra.mxu0 0.0
    %135 = vmatpush.msra.mxu0 0.0
    %136 = vmatpush.msra.mxu0 0.0
    %137 = vmatpush.msra.mxu0 %v70
    %138 = vmatpush.msra.mxu0 %v69
    %139 = vmatpush.msra.mxu0 %v68
    %140 = vmatpush.msra.mxu0 %v67
    %141 = vmatmul.f32.gmra.mxu0 %v78
    %v142 = vpop.f32.mrf.mxu0
    %v143 = vadd.f32 %v74, %v142
    %144 = vmatmul.f32.gmra.mxu0 %v81
    %v145 = vpop.f32.mrf.mxu0
    %v146 = vadd.f32 %v74, %v145
    %147 = vmatmul.f32.gmra.mxu0 %v84
    %v148 = vpop.f32.mrf.mxu0
    %v149 = vadd.f32 %v74, %v148
    %150 = vmatmul.f32.gmra.mxu0 %v87
    %v151 = vpop.f32.mrf.mxu0
    %v152 = vadd.f32 %v74, %v151
    %153 = vmatmul.f32.gmra.mxu0 %v90
    %v154 = vpop.f32.mrf.mxu0
    %v155 = vadd.f32 %v74, %v154
    %156 = vmatmul.f32.gmra.mxu0 %v93
    %v157 = vpop.f32.mrf.mxu0
    %v158 = vadd.f32 %v74, %v157
    %159 = vmatmul.f32.gmra.mxu0 %v96
    %v160 = vpop.f32.mrf.mxu0
    %v161 = vadd.f32 %v74, %v160
    %162 = vmatmul.f32.gmra.mxu0 %v99
    %v163 = vpop.f32.mrf.mxu0
    %v164 = vadd.f32 %v74, %v163
    %165 = vmatmul.f32.gmra.mxu0 %v102
    %v166 = vpop.f32.mrf.mxu0
    %v167 = vadd.f32 %v74, %v166
    %168 = vmatmul.f32.gmra.mxu0 %v105
    %v169 = vpop.f32.mrf.mxu0
    %v170 = vadd.f32 %v74, %v169
    %171 = vmatmul.f32.gmra.mxu0 %v108
    %v172 = vpop.f32.mrf.mxu0
    %v173 = vadd.f32 %v74, %v172
    %174 = vmatmul.f32.gmra.mxu0 %v111
    %v175 = vpop.f32.mrf.mxu0
    %v176 = vadd.f32 %v74, %v175
    %177 = vmatmul.f32.gmra.mxu0 %v114
    %v178 = vpop.f32.mrf.mxu0
    %v179 = vadd.f32 %v74, %v178
    %180 = vmatmul.f32.gmra.mxu0 %v117
    %v181 = vpop.f32.mrf.mxu0
    %v182 = vadd.f32 %v74, %v181
    %183 = vmatmul.f32.gmra.mxu0 %v120
    %v184 = vpop.f32.mrf.mxu0
    %v185 = vadd.f32 %v74, %v184
    %186 = vmatmul.f32.gmra.mxu0 %v123
    %v187 = vpop.f32.mrf.mxu0
    %v188 = vadd.f32 %v74, %v187
    %189 = vdwg.mxu0
    %v190 = vmul.f32 %v51, %v143
    %v191 = vmul.f32 %v52, %v146
    %v192 = vmul.f32 %v53, %v149
    %v193 = vmul.f32 %v54, %v152
    %v194 = vmul.f32 %v55, %v155
    %v195 = vmul.f32 %v56, %v158
    %v196 = vmul.f32 %v57, %v161
    %v197 = vmul.f32 %v58, %v164
    %v198 = vmul.f32 %v59, %v167
    %v199 = vmul.f32 %v60, %v170
    %v200 = vmul.f32 %v61, %v173
    %v201 = vmul.f32 %v62, %v176
    %v202 = vmul.f32 %v63, %v179
    %v203 = vmul.f32 %v64, %v182
    %v204 = vmul.f32 %v65, %v185
    %v205 = vmul.f32 %v66, %v188
    %v206 = vsel %vm76, %v190, 0.0
    %207 = vadd.xlane.f32.xlu0 %v206
    %v208 = vpop.xlane.xlu0 %207
    %v209 = vsel %vm76, %v191, 0.0
    %210 = vadd.xlane.f32.xlu0 %v209
    %v211 = vpop.xlane.xlu0 %210
    %v212 = vsel %vm76, %v192, 0.0
    %213 = vadd.xlane.f32.xlu0 %v212
    %v214 = vpop.xlane.xlu0 %213
    %v215 = vsel %vm76, %v193, 0.0
    %216 = vadd.xlane.f32.xlu0 %v215
    %v217 = vpop.xlane.xlu0 %216
    %v218 = vsel %vm76, %v194, 0.0
    %219 = vadd.xlane.f32.xlu0 %v218
    %v220 = vpop.xlane.xlu0 %219
    %v221 = vsel %vm76, %v195, 0.0
    %222 = vadd.xlane.f32.xlu0 %v221
    %v223 = vpop.xlane.xlu0 %222
    %v224 = vsel %vm76, %v196, 0.0
    %225 = vadd.xlane.f32.xlu0 %v224
    %v226 = vpop.xlane.xlu0 %225
    %v227 = vsel %vm76, %v197, 0.0
    %228 = vadd.xlane.f32.xlu0 %v227
    %v229 = vpop.xlane.xlu0 %228
    %v230 = vsel %vm76, %v198, 0.0
    %231 = vadd.xlane.f32.xlu0 %v230
    %v232 = vpop.xlane.xlu0 %231
    %v233 = vsel %vm76, %v199, 0.0
    %234 = vadd.xlane.f32.xlu0 %v233
    %v235 = vpop.xlane.xlu0 %234
    %v236 = vsel %vm76, %v200, 0.0
    %237 = vadd.xlane.f32.xlu0 %v236
    %v238 = vpop.xlane.xlu0 %237
    %v239 = vsel %vm76, %v201, 0.0
    %240 = vadd.xlane.f32.xlu0 %v239
    %v241 = vpop.xlane.xlu0 %240
    %v242 = vsel %vm76, %v202, 0.0
    %243 = vadd.xlane.f32.xlu0 %v242
    %v244 = vpop.xlane.xlu0 %243
    %v245 = vsel %vm76, %v203, 0.0
    %246 = vadd.xlane.f32.xlu0 %v245
    %v247 = vpop.xlane.xlu0 %246
    %v248 = vsel %vm76, %v204, 0.0
    %249 = vadd.xlane.f32.xlu0 %v248
    %v250 = vpop.xlane.xlu0 %249
    %v251 = vsel %vm76, %v205, 0.0
    %252 = vadd.xlane.f32.xlu0 %v251
    %v253 = vpop.xlane.xlu0 %252
    %v254 = vstv %s72
    %v255 = vadd.f32 %v254, %v208
    %v256 = vadd.f32 %v254, %v211
    %v257 = vadd.f32 %v254, %v214
    %v258 = vadd.f32 %v254, %v217
    %v259 = vadd.f32 %v254, %v220
    %v260 = vadd.f32 %v254, %v223
    %v261 = vadd.f32 %v254, %v226
    %v262 = vadd.f32 %v254, %v229
    %v263 = vadd.f32 %v254, %v232
    %v264 = vadd.f32 %v254, %v235
    %v265 = vadd.f32 %v254, %v238
    %v266 = vadd.f32 %v254, %v241
    %v267 = vadd.f32 %v254, %v244
    %v268 = vadd.f32 %v254, %v247
    %v269 = vadd.f32 %v254, %v250
    %v270 = vadd.f32 %v254, %v253
    %v287 = vlaneseq
    %v288 = vand.u32 %v287, 127
    %v289 = vperm.slane %v255, %v288
    %v290 = vadd.s32 %v288, 4294967288
    %v291 = vperm.slane %v256, %v290
    %vm292 = vcmask 130112
    %v293 = vsel %vm292, %v291, %v289
    %v294 = vadd.s32 %v288, 4294967280
    %v295 = vperm.slane %v257, %v294
    %vm296 = vcmask 195712
    %v297 = vsel %vm296, %v295, %v293
    %v298 = vadd.s32 %v288, 4294967272
    %v299 = vperm.slane %v258, %v298
    %vm300 = vcmask 261312
    %v301 = vsel %vm300, %v299, %v297
    %v302 = vadd.s32 %v288, 4294967264
    %v303 = vperm.slane %v259, %v302
    %vm304 = vcmask 326912
    %v305 = vsel %vm304, %v303, %v301
    %v306 = vadd.s32 %v288, 4294967256
    %v307 = vperm.slane %v260, %v306
    %vm308 = vcmask 392512
    %v309 = vsel %vm308, %v307, %v305
    %v310 = vadd.s32 %v288, 4294967248
    %v311 = vperm.slane %v261, %v310
    %vm312 = vcmask 458112
    %v313 = vsel %vm312, %v311, %v309
    %v314 = vadd.s32 %v288, 4294967240
    %v315 = vperm.slane %v262, %v314
    %vm316 = vcmask 523712
    %v317 = vsel %vm316, %v315, %v313
    %v318 = vadd.s32 %v288, 4294967232
    %v319 = vperm.slane %v263, %v318
    %vm320 = vcmask 589312
    %v321 = vsel %vm320, %v319, %v317
    %v322 = vadd.s32 %v288, 4294967224
    %v323 = vperm.slane %v264, %v322
    %vm324 = vcmask 654912
    %v325 = vsel %vm324, %v323, %v321
    %v326 = vadd.s32 %v288, 4294967216
    %v327 = vperm.slane %v265, %v326
    %vm328 = vcmask 720512
    %v329 = vsel %vm328, %v327, %v325
    %v330 = vadd.s32 %v288, 4294967208
    %v331 = vperm.slane %v266, %v330
    %vm332 = vcmask 786112
    %v333 = vsel %vm332, %v331, %v329
    %v334 = vadd.s32 %v288, 4294967200
    %v335 = vperm.slane %v267, %v334
    %vm336 = vcmask 851712
    %v337 = vsel %vm336, %v335, %v333
    %v338 = vadd.s32 %v288, 4294967192
    %v339 = vperm.slane %v268, %v338
    %vm340 = vcmask 917312
    %v341 = vsel %vm340, %v339, %v337
    %v342 = vadd.s32 %v288, 4294967184
    %v343 = vperm.slane %v269, %v342
    %vm344 = vcmask 982912
    %v345 = vsel %vm344, %v343, %v341
    %v346 = vadd.s32 %v288, 4294967176
    %v347 = vperm.slane %v270, %v346
    %vm348 = vcmask 1048512
    %v349 = vsel %vm348, %v347, %v345
    %351 = vst [vmem:[#allocation8] sm:$0x1] %v349
    // Predicated region
    $region26: #{tpu_custom_call.1} parent=1 // pred_check
      _
    $region27: #{tpu_custom_call.1} parent=1 // pred_check_branch
      %353 = sbr.rel (0) target = $region29
    $region28: #{tpu_custom_call.1} parent=1 // pred_region
      %355 = vsyncadd [#allocation5], 0
      %s357 = sshll.u32 [#allocation8], 4
      %s358 = int_to_ptr.vmem [resolvable:$true] %s357
      %s359 = sshll.u32 %s4, 4
      %s360 = int_to_ptr.hbm [resolvable:$true] %s359
      %362 = dma.vmem_to_hbm [thread:$0]  %s358, 16, %s360, [#allocation5]
    $region29: #{tpu_custom_call.1} parent=1 // pred_fallthru
      _
    // Predicated region
    $region30: #{tpu_custom_call.1} parent=1 // pred_check
      _
    $region31: #{tpu_custom_call.1} parent=1 // pred_check_branch
      %364 = sbr.rel (0) target = $region33
    $region32: #{tpu_custom_call.1} parent=1 // pred_region
      %366 = dma.done [#allocation5], 16
    $region33: #{tpu_custom_call.1} parent=1 // pred_fallthru
      _
    %367 = vsyncpa [#allocation4], 1
    %368 = vsyncpa [#allocation7], 1
    %369 = vsyncpa [#allocation5], 1

</llo_original>
